<compile_context>
chip_gen: v7x
topology: tpu7x:2x2x1
jax: 0.10.0
libtpu: 0.0.40
codegen_flags: <defaults>
</compile_context>

<pallas_src>
import functools

import numpy as np
import jax
import jax.numpy as jnp
from jax.experimental import pallas as pl
from jax.experimental.pallas import tpu as pltpu


def gaussian_1d(window_size: int, sigma: float) -> np.ndarray:
    # Same construction as the PyTorch `gaussian` helper (float32 throughout).
    x = np.arange(window_size, dtype=np.float32)
    g = np.exp(-((x - window_size // 2) ** 2) / (2.0 * sigma ** 2)).astype(np.float32)
    return (g / g.sum()).astype(np.float32)


def _clipped_band_matrix(size: int, g: np.ndarray) -> np.ndarray:
    """(size, size) matrix M with M[r, c] = g[r - c + pad] inside the band.

    Right-multiplying a row-major image by M is exactly a zero-padded ("same")
    1-D cross-correlation with taps `g` along the last axis; left-multiplying
    by M.T is the same along the first axis.  The boundary zero padding is
    folded into the clipped band, so no explicit spatial padding is needed.
    """
    k = g.shape[0]
    pad = k // 2
    idx = np.arange(size)
    diff = idx[:, None] - idx[None, :]           # r - c
    taps = g[np.clip(diff + pad, 0, k - 1)]
    return np.where(np.abs(diff) <= pad, taps, 0.0).astype(np.float32)


def _ssim_kernel(i1_ref, i2_ref, dh_ref, av_ref, out_ref, *, H, H8, L):
    # i1_ref / i2_ref: (1, H8, L) lane-packed maps (L = G * C * W lanes).
    # dh_ref:          (L, L) block-diagonal clipped-band matrix (horizontal).
    # av_ref:          (H8, H8) clipped-band matrix (vertical).
    # out_ref:         (1, 1, L) per-lane column sums of the SSIM map.
    x1 = i1_ref[0]                      # (H8, L)
    x2 = i2_ref[0]
    dh = dh_ref[...]                    # (L, L)
    av = av_ref[...]                    # (H8, H8)

    # Fuse the five depthwise convolutions: stack the statistics along the
    # sublane axis (offsets s*H8 are 8-aligned) and run the horizontal
    # (lane-axis) Gaussian pass as ONE MXU matmul.  The block-diagonal
    # structure of `dh` keeps the lane-packed channel/sample maps independent
    # and implements the zero-padded boundary.
    stats = jnp.concatenate([x1, x2, x1 * x1, x2 * x2, x1 * x2], axis=0)   # (5*H8, L)
    horiz = jnp.dot(stats, dh, preferred_element_type=jnp.float32)         # (5*H8, L)

    # Vertical pass on the MXU: one small band matmul per statistic plane
    # (no kron(eye(5)) zero blocks, no VALU tap loop, no VMEM scratch).
    conv = [
        jnp.dot(av, horiz[s * H8:(s + 1) * H8, :],
                preferred_element_type=jnp.float32)
        for s in range(5)
    ]
    mu1, mu2, e11, e22, e12 = conv

    mu1_sq = mu1 * mu1
    mu2_sq = mu2 * mu2
    mu1_mu2 = mu1 * mu2
    sigma1_sq = e11 - mu1_sq
    sigma2_sq = e22 - mu2_sq
    sigma12 = e12 - mu1_mu2

    C1 = 0.01 ** 2
    C2 = 0.03 ** 2
    # Exact f32 division (no approximate reciprocal) to preserve accuracy.
    ssim_map = ((2.0 * mu1_mu2 + C1) * (2.0 * sigma12 + C2)) / (
        (mu1_sq + mu2_sq + C1) * (sigma1_sq + sigma2_sq + C2))

    if H8 != H:
        # Exclude the zero-padded rows H..H8-1 from the reduction.
        row = jax.lax.broadcasted_iota(jnp.int32, (H8, L), 0)
        ssim_map = jnp.where(row < H, ssim_map, 0.0)

    out_ref[...] = jnp.sum(ssim_map, axis=0, keepdims=True).reshape(1, 1, L)


def _choose_group(n: int, cw: int, target_lanes: int = 512,
                  max_lanes: int = 1024) -> int:
    """How many batch samples to lane-pack per grid step.

    Prefer the smallest divisor of n that reaches a lane-dense working width
    (>= target_lanes); otherwise pack as many samples as fit under max_lanes
    (keeps the (L, L) block-diagonal band matrix small in VMEM).
    """
    divisors = [d for d in range(1, n + 1) if n % d == 0]
    for d in divisors:
        if target_lanes <= d * cw <= max_lanes:
            return d
    best = 1
    for d in divisors:
        if d * cw <= max_lanes:
            best = d
    return best


def ssim_pallas(img1, img2, *, window_size=11, channel=3, size_average=True):
    assert img1.shape == img2.shape, "Input images must have the same dimensions"
    N, C, H, W = img1.shape
    assert C == channel, "Input images must have the same number of channels"

    H8 = -(-H // 8) * 8                       # sublane-aligned row count
    g = gaussian_1d(window_size, 1.5)

    G = _choose_group(N, C * W)               # samples lane-packed per step
    L = G * C * W
    steps = N // G

    # Lane-pack G samples x C channels per grid step:
    # (N, C, H, W) -> (steps, H8, G*C*W).  Only wrapper-side data movement.
    def pack(x):
        x = x.astype(jnp.float32)
        if H8 != H:
            x = jnp.pad(x, ((0, 0), (0, 0), (0, H8 - H), (0, 0)))
        x = x.reshape(steps, G, C, H8, W)
        x = jnp.transpose(x, (0, 3, 1, 2, 4))        # (steps, H8, G, C, W)
        return x.reshape(steps, H8, L)

    x1 = pack(img1)
    x2 = pack(img2)

    # Horizontal pass: block-diagonal clipped-band matrix across the packed
    # (sample, channel) groups.  Vertical pass: (H8, H8) band matrix.
    a_h = _clipped_band_matrix(W, g)
    d_h = jnp.asarray(np.kron(np.eye(G * C, dtype=np.float32), a_h))   # (L, L)
    a_v = jnp.asarray(_clipped_band_matrix(H8, g).T)                   # (H8, H8)

    kernel = functools.partial(_ssim_kernel, H=H, H8=H8, L=L)

    matmul_flops = steps * (2 * (5 * H8) * L * L        # horizontal band matmul
                            + 5 * 2 * H8 * H8 * L)      # vertical band matmuls
    ew_flops = 30 * steps * H8 * L                      # SSIM elementwise math
    cost = pl.CostEstimate(
        flops=matmul_flops + ew_flops,
        transcendentals=0,
        bytes_accessed=(2 * steps * H8 * L * 4          # both images
                        + (L * L + H8 * H8) * 4         # band matrices
                        + steps * L * 4))               # column-sum output

    sums = pl.pallas_call(
        kernel,
        out_shape=jax.ShapeDtypeStruct((steps, 1, L), jnp.float32),
        grid_spec=pltpu.PrefetchScalarGridSpec(
            num_scalar_prefetch=0,
            grid=(steps,),
            in_specs=[
                pl.BlockSpec((1, H8, L), lambda s: (s, 0, 0)),
                pl.BlockSpec((1, H8, L), lambda s: (s, 0, 0)),
                pl.BlockSpec((L, L), lambda s: (0, 0)),      # constant operand
                pl.BlockSpec((H8, H8), lambda s: (0, 0)),    # constant operand
            ],
            out_specs=pl.BlockSpec((1, 1, L), lambda s: (s, 0, 0)),
        ),
        compiler_params=pltpu.CompilerParams(
            dimension_semantics=("parallel",),
            vmem_limit_bytes=48 * 1024 * 1024,
        ),
        cost_estimate=cost,
    )(x1, x2, d_h, a_v)

    # Lane-group reduction (tiny) done in the wrapper: lanes are ordered
    # (g, c, w) within a step, so group g covers a contiguous C*W slab.
    per_sample = sums.reshape(steps, G, C * W).sum(axis=-1).reshape(N)
    if size_average:
        return jnp.sum(per_sample) / (N * C * H * W)
    else:
        # Matches ssim_map.mean([1, 2, 3]) in the PyTorch module.
        return per_sample / (C * H * W)


def ssim_reference_np(img1, img2, *, window_size=11, size_average=True):
    # Independent float64 NumPy reference: direct 2-D window accumulation,
    # matching F.conv2d(..., padding=window_size//2, groups=C) exactly.
    x1 = np.asarray(img1, dtype=np.float64)
    x2 = np.asarray(img2, dtype=np.float64)
    N, C, H, W = x1.shape
    g = gaussian_1d(window_size, 1.5).astype(np.float64)   # same f32 taps, promoted
    w2 = np.outer(g, g)
    pad = window_size // 2

    def conv(x):
        xp = np.pad(x, ((0, 0), (0, 0), (pad, pad), (pad, pad)))
        out = np.zeros_like(x)
        for a in range(window_size):
            for b in range(window_size):
                out += w2[a, b] * xp[:, :, a:a + H, b:b + W]
        return out

    mu1, mu2 = conv(x1), conv(x2)
    mu1_sq, mu2_sq, mu1_mu2 = mu1 * mu1, mu2 * mu2, mu1 * mu2
    sigma1_sq = conv(x1 * x1) - mu1_sq
    sigma2_sq = conv(x2 * x2) - mu2_sq
    sigma12 = conv(x1 * x2) - mu1_mu2
    C1, C2 = 0.01 ** 2, 0.03 ** 2
    ssim_map = ((2 * mu1_mu2 + C1) * (2 * sigma12 + C2)) / (
        (mu1_sq + mu2_sq + C1) * (sigma1_sq + sigma2_sq + C2))
    if size_average:
        return ssim_map.mean()
    return ssim_map.mean(axis=(1, 2, 3))


if __name__ == "__main__":
    key = jax.random.PRNGKey(0)
    k1, k2 = jax.random.split(key)
    N, C, H, W = 2, 3, 16, 16   # module default channel=3
    img1 = jax.random.uniform(k1, (N, C, H, W), dtype=jnp.float32)
    img2 = jax.random.uniform(k2, (N, C, H, W), dtype=jnp.float32)

    out = jax.block_until_ready(
        ssim_pallas(img1, img2, window_size=11, channel=C, size_average=True))
    ref = ssim_reference_np(np.asarray(img1), np.asarray(img2),
                            window_size=11, size_average=True)
    # Tolerance accounts for the two f32 MXU band-matmul passes vs. the
    # float64 reference; still far tighter than any bf16-level error.
    np.testing.assert_allclose(np.asarray(out), ref, rtol=1e-3, atol=2e-5)

    out_b = jax.block_until_ready(
        ssim_pallas(img1, img2, window_size=11, channel=C, size_average=False))
    ref_b = ssim_reference_np(np.asarray(img1), np.asarray(img2),
                              window_size=11, size_average=False)
    np.testing.assert_allclose(np.asarray(out_b), ref_b, rtol=1e-3, atol=2e-5)

    print("KERNEL_OK")
</pallas_src>

<mosaic_0001>
module attributes {stable_mosaic.version = 11 : i64} {
  func.func @_ssim_kernel(%arg0: i32, %arg1: memref<1x16x96xf32, #tpu.memory_space<vmem>>, %arg2: memref<1x16x96xf32, #tpu.memory_space<vmem>>, %arg3: memref<96x96xf32, #tpu.memory_space<vmem>>, %arg4: memref<16x16xf32, #tpu.memory_space<vmem>>, %arg5: memref<1x1x96xf32, #tpu.memory_space<vmem>>) attributes {dimension_semantics = [#tpu.dimension_semantics<parallel>], iteration_bounds = array<i64: 1>, scalar_prefetch = 0 : i64, scratch_operands = 0 : i64, tpu.core_type = #tpu.core_type<tc>, window_params = [{transform_indices = @transform_0, window_bounds = array<i64: 1, 16, 96>}, {transform_indices = @transform_1, window_bounds = array<i64: 1, 16, 96>}, {pipeline_mode = #tpu.pipeline_mode<synchronous>, transform_indices = @transform_2, window_bounds = array<i64: 96, 96>}, {pipeline_mode = #tpu.pipeline_mode<synchronous>, transform_indices = @transform_3, window_bounds = array<i64: 16, 16>}, {transform_indices = @transform_4, window_bounds = array<i64: 1, 1, 96>}]} {
    %c0 = arith.constant 0 : index
    %c0_0 = arith.constant 0 : index
    %c0_1 = arith.constant 0 : index
    %0 = vector.load %arg1[%c0, %c0_0, %c0_1] : memref<1x16x96xf32, #tpu.memory_space<vmem>>, vector<1x16x96xf32>
    %1 = vector.shape_cast %0 : vector<1x16x96xf32> to vector<16x96xf32>
    %c0_2 = arith.constant 0 : index
    %c0_3 = arith.constant 0 : index
    %c0_4 = arith.constant 0 : index
    %2 = vector.load %arg2[%c0_2, %c0_3, %c0_4] : memref<1x16x96xf32, #tpu.memory_space<vmem>>, vector<1x16x96xf32>
    %3 = vector.shape_cast %2 : vector<1x16x96xf32> to vector<16x96xf32>
    %c0_5 = arith.constant 0 : index
    %c0_6 = arith.constant 0 : index
    %4 = vector.load %arg3[%c0_5, %c0_6] : memref<96x96xf32, #tpu.memory_space<vmem>>, vector<96x96xf32>
    %c0_7 = arith.constant 0 : index
    %c0_8 = arith.constant 0 : index
    %5 = vector.load %arg4[%c0_7, %c0_8] : memref<16x16xf32, #tpu.memory_space<vmem>>, vector<16x16xf32>
    %6 = arith.mulf %1, %1 : vector<16x96xf32>
    %7 = arith.mulf %3, %3 : vector<16x96xf32>
    %8 = arith.mulf %1, %3 : vector<16x96xf32>
    %9 = tpu.concatenate %1, %3, %6, %7, %8 in 0 : vector<16x96xf32>, vector<16x96xf32>, vector<16x96xf32>, vector<16x96xf32>, vector<16x96xf32> -> vector<80x96xf32>
    %cst = arith.constant dense<0.000000e+00> : vector<80x96xf32>
    %10 = tpu.matmul %9, %4, %cst {dimension_numbers = #tpu.dot_dimension_numbers<[1], [0], [0], [1], [0, 0, 1, 1], [], []>} : vector<80x96xf32>, vector<96x96xf32>, vector<80x96xf32> -> vector<80x96xf32>
    %11 = vector.extract_strided_slice %10 {offsets = [0, 0], sizes = [16, 96], strides = [1, 1]} : vector<80x96xf32> to vector<16x96xf32>
    %cst_9 = arith.constant dense<0.000000e+00> : vector<16x96xf32>
    %12 = tpu.matmul %5, %11, %cst_9 {dimension_numbers = #tpu.dot_dimension_numbers<[1], [0], [0], [1], [0, 0, 1, 1], [], []>} : vector<16x16xf32>, vector<16x96xf32>, vector<16x96xf32> -> vector<16x96xf32>
    %13 = vector.extract_strided_slice %10 {offsets = [16, 0], sizes = [16, 96], strides = [1, 1]} : vector<80x96xf32> to vector<16x96xf32>
    %cst_10 = arith.constant dense<0.000000e+00> : vector<16x96xf32>
    %14 = tpu.matmul %5, %13, %cst_10 {dimension_numbers = #tpu.dot_dimension_numbers<[1], [0], [0], [1], [0, 0, 1, 1], [], []>} : vector<16x16xf32>, vector<16x96xf32>, vector<16x96xf32> -> vector<16x96xf32>
    %15 = vector.extract_strided_slice %10 {offsets = [32, 0], sizes = [16, 96], strides = [1, 1]} : vector<80x96xf32> to vector<16x96xf32>
    %cst_11 = arith.constant dense<0.000000e+00> : vector<16x96xf32>
    %16 = tpu.matmul %5, %15, %cst_11 {dimension_numbers = #tpu.dot_dimension_numbers<[1], [0], [0], [1], [0, 0, 1, 1], [], []>} : vector<16x16xf32>, vector<16x96xf32>, vector<16x96xf32> -> vector<16x96xf32>
    %17 = vector.extract_strided_slice %10 {offsets = [48, 0], sizes = [16, 96], strides = [1, 1]} : vector<80x96xf32> to vector<16x96xf32>
    %cst_12 = arith.constant dense<0.000000e+00> : vector<16x96xf32>
    %18 = tpu.matmul %5, %17, %cst_12 {dimension_numbers = #tpu.dot_dimension_numbers<[1], [0], [0], [1], [0, 0, 1, 1], [], []>} : vector<16x16xf32>, vector<16x96xf32>, vector<16x96xf32> -> vector<16x96xf32>
    %19 = vector.extract_strided_slice %10 {offsets = [64, 0], sizes = [16, 96], strides = [1, 1]} : vector<80x96xf32> to vector<16x96xf32>
    %cst_13 = arith.constant dense<0.000000e+00> : vector<16x96xf32>
    %20 = tpu.matmul %5, %19, %cst_13 {dimension_numbers = #tpu.dot_dimension_numbers<[1], [0], [0], [1], [0, 0, 1, 1], [], []>} : vector<16x16xf32>, vector<16x96xf32>, vector<16x96xf32> -> vector<16x96xf32>
    %21 = arith.mulf %12, %12 : vector<16x96xf32>
    %22 = arith.mulf %14, %14 : vector<16x96xf32>
    %23 = arith.mulf %12, %14 : vector<16x96xf32>
    %24 = arith.subf %16, %21 : vector<16x96xf32>
    %25 = arith.subf %18, %22 : vector<16x96xf32>
    %26 = arith.subf %20, %23 : vector<16x96xf32>
    %cst_14 = arith.constant 2.000000e+00 : f32
    %27 = vector.broadcast %cst_14 : f32 to vector<16x96xf32>
    %28 = arith.mulf %27, %23 : vector<16x96xf32>
    %cst_15 = arith.constant 9.99999974E-5 : f32
    %29 = vector.broadcast %cst_15 : f32 to vector<16x96xf32>
    %30 = arith.addf %28, %29 : vector<16x96xf32>
    %cst_16 = arith.constant 2.000000e+00 : f32
    %31 = vector.broadcast %cst_16 : f32 to vector<16x96xf32>
    %32 = arith.mulf %31, %26 : vector<16x96xf32>
    %cst_17 = arith.constant 8.99999984E-4 : f32
    %33 = vector.broadcast %cst_17 : f32 to vector<16x96xf32>
    %34 = arith.addf %32, %33 : vector<16x96xf32>
    %35 = arith.mulf %30, %34 : vector<16x96xf32>
    %36 = arith.addf %21, %22 : vector<16x96xf32>
    %cst_18 = arith.constant 9.99999974E-5 : f32
    %37 = vector.broadcast %cst_18 : f32 to vector<16x96xf32>
    %38 = arith.addf %36, %37 : vector<16x96xf32>
    %39 = arith.addf %24, %25 : vector<16x96xf32>
    %cst_19 = arith.constant 8.99999984E-4 : f32
    %40 = vector.broadcast %cst_19 : f32 to vector<16x96xf32>
    %41 = arith.addf %39, %40 : vector<16x96xf32>
    %42 = arith.mulf %38, %41 : vector<16x96xf32>
    %43 = arith.divf %35, %42 : vector<16x96xf32>
    %cst_20 = arith.constant dense<0.000000e+00> : vector<96xf32>
    %44 = vector.multi_reduction <add>, %43, %cst_20 [0] : vector<16x96xf32> to vector<96xf32>
    %45 = vector.shape_cast %44 : vector<96xf32> to vector<1x96xf32>
    %46 = vector.shape_cast %45 : vector<1x96xf32> to vector<1x1x96xf32>
    %c0_21 = arith.constant 0 : index
    %c0_22 = arith.constant 0 : index
    %c0_23 = arith.constant 0 : index
    %47 = vector.load %arg5[%c0_21, %c0_22, %c0_23] : memref<1x1x96xf32, #tpu.memory_space<vmem>>, vector<1x1x96xf32>
    tpu.vector_store %arg5[%c0_21, %c0_22, %c0_23], %46 {strides = array<i32>} : memref<1x1x96xf32, #tpu.memory_space<vmem>>, vector<1x1x96xf32>,
    return
  }
  func.func @transform_0(%arg0: i32) -> (i32, i32, i32) {
    %c0_i32 = arith.constant 0 : i32
    %c0_i32_0 = arith.constant 0 : i32
    %c0_i32_1 = arith.constant 0 : i32
    return %arg0, %c0_i32, %c0_i32_0 : i32, i32, i32
  }
  func.func @transform_1(%arg0: i32) -> (i32, i32, i32) {
    %c0_i32 = arith.constant 0 : i32
    %c0_i32_0 = arith.constant 0 : i32
    %c0_i32_1 = arith.constant 0 : i32
    return %arg0, %c0_i32, %c0_i32_0 : i32, i32, i32
  }
  func.func @transform_2(%arg0: i32) -> (i32, i32) {
    %c0_i32 = arith.constant 0 : i32
    %c0_i32_0 = arith.constant 0 : i32
    %c0_i32_1 = arith.constant 0 : i32
    return %c0_i32, %c0_i32_0 : i32, i32
  }
  func.func @transform_3(%arg0: i32) -> (i32, i32) {
    %c0_i32 = arith.constant 0 : i32
    %c0_i32_0 = arith.constant 0 : i32
    %c0_i32_1 = arith.constant 0 : i32
    return %c0_i32, %c0_i32_0 : i32, i32
  }
  func.func @transform_4(%arg0: i32) -> (i32, i32, i32) {
    %c0_i32 = arith.constant 0 : i32
    %c0_i32_0 = arith.constant 0 : i32
    %c0_i32_1 = arith.constant 0 : i32
    return %arg0, %c0_i32, %c0_i32_0 : i32, i32, i32
  }
}

</mosaic_0001>

<llo_original>
// kernel: tpu_custom_call.1
$region0: #{tpu_custom_call.1}
  #allocation0 [shape = 'u32[]', space=smem, size = 0x4, offset = 0x4, fixed_abs, tag = 'smem constant byte address 0x4 - core index']
  #allocation1 [shape = 'u32[144,128]{1,0:T(1,128)}', space=vmem, size = 0x12000, scoped, tag = 'internal scratch']
  %s0 = inlined_call_operand.hbm [shape: f32[1,16,96], index: 0, kind: input, shape index: {}]
  %s1 = inlined_call_operand.hbm [shape: f32[1,16,96], index: 1, kind: input, shape index: {}]
  %s2 = inlined_call_operand.hbm [shape: f32[96,96], index: 2, kind: input, shape index: {}]
  %s3 = inlined_call_operand.hbm [shape: f32[16,16], index: 3, kind: input, shape index: {}]
  %s4 = inlined_call_operand.hbm [shape: f32[1,1,96], index: 4, kind: output, shape index: {}]
  %s5 = sld [smem:[#allocation0]]
  $region42: #{tpu_custom_call.1} parent=0
    _
  %s7 = ssub.s32 1, %s5
  %s8 = scalar_select 0, %s7, %s5
  $region1: #{tpu_custom_call.1} parent=0
    #allocation2 [shape = 'u8[8192]{0}', space=vmem, size = 0x2000, scoped, tag = 'input window, operand 0, single buffered']
    #allocation3 [shape = 's32[1]{0}', space=sflag, size = 0x4, scoped, tag = 'scoped memory for tpu_custom_call.1']
    #allocation4 [shape = 's32[1]{0}', space=sflag, size = 0x4, scoped, tag = 'scoped memory for tpu_custom_call.1']
    #allocation5 [shape = 'u8[8192]{0}', space=vmem, size = 0x2000, scoped, tag = 'input window, operand 1, single buffered']
    #allocation6 [shape = 's32[1]{0}', space=sflag, size = 0x4, scoped, tag = 'scoped memory for tpu_custom_call.1']
    #allocation7 [shape = 'u8[49152]{0}', space=vmem, size = 0xc000, scoped, tag = 'input window, operand 2, single buffered']
    #allocation8 [shape = 'u8[8192]{0}', space=vmem, size = 0x2000, scoped, tag = 'input window, operand 3, single buffered']
    #allocation9 [shape = 's32[1]{0}', space=sflag, size = 0x4, scoped, tag = 'scoped memory for tpu_custom_call.1']
    #allocation10 [shape = 'u8[512]{0}', space=vmem, size = 0x400, scoped, tag = 'output window, operand 0, single buffered']
    %9 = vsyncpa [#allocation3], 0
    %10 = vsyncpa [#allocation6], 0
    %11 = vsyncpa [#allocation9], 0
    %12 = vsyncpa [#allocation4], 0
    // Predicated region
    $region2: #{tpu_custom_call.1} parent=1 // pred_check
      _
    $region3: #{tpu_custom_call.1} parent=1 // pred_check_branch
      %14 = sbr.rel (0) target = $region5
    $region4: #{tpu_custom_call.1} parent=1 // pred_region
      %s16 = ssub.s32 256, 256
      %17 = vsyncadd [#allocation3], %s16
      %s18 = sshll.u32 [#allocation2], 4
      %s19 = int_to_ptr.vmem [resolvable:$true] %s18
      %24 = dma.hbm_to_vmem [thread:$0]  %s0, 256, %s19, [#allocation3], 128, 128, 8
    $region5: #{tpu_custom_call.1} parent=1 // pred_fallthru
      _
    // Predicated region
    $region6: #{tpu_custom_call.1} parent=1 // pred_check
      _
    $region7: #{tpu_custom_call.1} parent=1 // pred_check_branch
      %26 = sbr.rel (0) target = $region9
    $region8: #{tpu_custom_call.1} parent=1 // pred_region
      %s28 = ssub.s32 256, 256
      %29 = vsyncadd [#allocation6], %s28
      %s30 = sshll.u32 [#allocation5], 4
      %s31 = int_to_ptr.vmem [resolvable:$true] %s30
      %36 = dma.hbm_to_vmem [thread:$0]  %s1, 256, %s31, [#allocation6], 128, 128, 8
    $region9: #{tpu_custom_call.1} parent=1 // pred_fallthru
      _
    // Predicated region
    $region10: #{tpu_custom_call.1} parent=1 // pred_check
      _
    $region11: #{tpu_custom_call.1} parent=1 // pred_check_branch
      %38 = sbr.rel (0) target = $region13
    $region12: #{tpu_custom_call.1} parent=1 // pred_region
      %s40 = ssub.s32 1536, 1536
      %41 = vsyncadd [#allocation6], %s40
      %s42 = sshll.u32 [#allocation7], 4
      %s43 = int_to_ptr.vmem [resolvable:$true] %s42
      %48 = dma.hbm_to_vmem [thread:$0]  %s2, 1536, %s43, [#allocation6], 128, 128, 8
    $region13: #{tpu_custom_call.1} parent=1 // pred_fallthru
      _
    // Predicated region
    $region14: #{tpu_custom_call.1} parent=1 // pred_check
      _
    $region15: #{tpu_custom_call.1} parent=1 // pred_check_branch
      %50 = sbr.rel (0) target = $region17
    $region16: #{tpu_custom_call.1} parent=1 // pred_region
      %s52 = ssub.s32 256, 256
      %53 = vsyncadd [#allocation9], %s52
      %s54 = sshll.u32 [#allocation8], 4
      %s55 = int_to_ptr.vmem [resolvable:$true] %s54
      %60 = dma.hbm_to_vmem [thread:$0]  %s3, 256, %s55, [#allocation9], 128, 128, 8
    $region17: #{tpu_custom_call.1} parent=1 // pred_fallthru
      _
    // Predicated region
    $region18: #{tpu_custom_call.1} parent=1 // pred_check
      _
    $region19: #{tpu_custom_call.1} parent=1 // pred_check_branch
      %62 = sbr.rel (0) target = $region21
    $region20: #{tpu_custom_call.1} parent=1 // pred_region
      %63 = dma.done [#allocation3], 256
    $region21: #{tpu_custom_call.1} parent=1 // pred_fallthru
      _
    // Predicated region
    $region22: #{tpu_custom_call.1} parent=1 // pred_check
      _
    $region23: #{tpu_custom_call.1} parent=1 // pred_check_branch
      %65 = sbr.rel (0) target = $region25
    $region24: #{tpu_custom_call.1} parent=1 // pred_region
      %66 = dma.done [#allocation6], 256
    $region25: #{tpu_custom_call.1} parent=1 // pred_fallthru
      _
    // Predicated region
    $region26: #{tpu_custom_call.1} parent=1 // pred_check
      _
    $region27: #{tpu_custom_call.1} parent=1 // pred_check_branch
      %68 = sbr.rel (0) target = $region29
    $region28: #{tpu_custom_call.1} parent=1 // pred_region
      %69 = dma.done [#allocation6], 1536
    $region29: #{tpu_custom_call.1} parent=1 // pred_fallthru
      _
    // Predicated region
    $region30: #{tpu_custom_call.1} parent=1 // pred_check
      _
    $region31: #{tpu_custom_call.1} parent=1 // pred_check_branch
      %71 = sbr.rel (0) target = $region33
    $region32: #{tpu_custom_call.1} parent=1 // pred_region
      %72 = dma.done [#allocation9], 256
    $region33: #{tpu_custom_call.1} parent=1 // pred_fallthru
      _
    %v73 = vld [vmem:[#allocation2] sm:$0xff]
    %v74 = vld [vmem:[#allocation2 + $0x8] sm:$0xff]
    %v75 = vld [vmem:[#allocation5] sm:$0xff]
    %v76 = vld [vmem:[#allocation5 + $0x8] sm:$0xff]
    %v77 = vld [vmem:[#allocation7] sm:$0xff]
    %v78 = vld [vmem:[#allocation7 + $0x8] sm:$0xff]
    %v79 = vld [vmem:[#allocation7 + $0x10] sm:$0xff]
    %v80 = vld [vmem:[#allocation7 + $0x18] sm:$0xff]
    %v81 = vld [vmem:[#allocation7 + $0x20] sm:$0xff]
    %v82 = vld [vmem:[#allocation7 + $0x28] sm:$0xff]
    %v83 = vld [vmem:[#allocation7 + $0x30] sm:$0xff]
    %v84 = vld [vmem:[#allocation7 + $0x38] sm:$0xff]
    %v85 = vld [vmem:[#allocation7 + $0x40] sm:$0xff]
    %v86 = vld [vmem:[#allocation7 + $0x48] sm:$0xff]
    %v87 = vld [vmem:[#allocation7 + $0x50] sm:$0xff]
    %v88 = vld [vmem:[#allocation7 + $0x58] sm:$0xff]
    %v89 = vld [vmem:[#allocation8] sm:$0xff]
    %v90 = vld [vmem:[#allocation8 + $0x8] sm:$0xff]
    %v91 = vmul.f32 %v73, %v73
    %v92 = vmul.f32 %v74, %v74
    %v93 = vmul.f32 %v75, %v75
    %v94 = vmul.f32 %v76, %v76
    %v95 = vmul.f32 %v73, %v75
    %v96 = vmul.f32 %v74, %v76
    %vm97 = vcmask 785408
    %v99 = vsel %vm97, %v73, 0
    %v102 = vsel %vm97, %v74, 0
    %v105 = vsel %vm97, %v75, 0
    %v108 = vsel %vm97, %v76, 0
    %v111 = vsel %vm97, %v91, 0
    %v114 = vsel %vm97, %v92, 0
    %v117 = vsel %vm97, %v93, 0
    %v120 = vsel %vm97, %v94, 0
    %v123 = vsel %vm97, %v95, 0
    %v126 = vsel %vm97, %v96, 0
    %128 = vmatprep.subr.mxu0 0.0
    %129 = vmatpush1.msra.mxu0 %v77
    %130 = vmatprep.subr.mxu0 0.0
    %131 = vmatpush1.msra.mxu0 %v78
    %132 = vmatprep.subr.mxu0 0.0
    %133 = vmatpush1.msra.mxu0 %v79
    %134 = vmatprep.subr.mxu0 0.0
    %135 = vmatpush1.msra.mxu0 %v80
    %136 = vmatprep.subr.mxu0 0.0
    %137 = vmatpush1.msra.mxu0 %v81
    %138 = vmatprep.subr.mxu0 0.0
    %139 = vmatpush1.msra.mxu0 %v82
    %140 = vmatprep.subr.mxu0 0.0
    %141 = vmatpush1.msra.mxu0 %v83
    %142 = vmatprep.subr.mxu0 0.0
    %143 = vmatpush1.msra.mxu0 %v84
    %144 = vmatprep.subr.mxu0 0.0
    %145 = vmatpush1.msra.mxu0 %v85
    %146 = vmatprep.subr.mxu0 0.0
    %147 = vmatpush1.msra.mxu0 %v86
    %148 = vmatprep.subr.mxu0 0.0
    %149 = vmatpush1.msra.mxu0 %v87
    %150 = vmatprep.subr.mxu0 0.0
    %151 = vmatpush1.msra.mxu0 %v88
    %152 = vmatprep.subr.mxu0 0.0
    %153 = vmatpush1.msra.mxu0 0.0
    %154 = vmatprep.subr.mxu0 0.0
    %155 = vmatpush1.msra.mxu0 0.0
    %156 = vmatprep.subr.mxu0 0.0
    %157 = vmatpush1.msra.mxu0 0.0
    %158 = vmatprep.subr.mxu0 0.0
    %159 = vmatpush1.msra.mxu0 0.0
    %160 = vmatprep.subr.mxu0 0.0
    %161 = vmatpush1.msra.mxu0 0.0
    %162 = vmatprep.subr.mxu0 0.0
    %163 = vmatpush1.msra.mxu0 0.0
    %164 = vmatprep.subr.mxu0 0.0
    %165 = vmatpush1.msra.mxu0 0.0
    %166 = vmatprep.subr.mxu0 0.0
    %167 = vmatpush1.msra.mxu0 0.0
    %168 = vmatprep.subr.mxu0 0.0
    %169 = vmatpush1.msra.mxu0 0.0
    %170 = vmatprep.subr.mxu0 0.0
    %171 = vmatpush1.msra.mxu0 0.0
    %172 = vmatprep.subr.mxu0 0.0
    %173 = vmatpush1.msra.mxu0 0.0
    %174 = vmatprep.subr.mxu0 0.0
    %175 = vmatpush1.msra.mxu0 0.0
    %176 = vmatprep.subr.mxu0 0.0
    %177 = vmatpush1.msra.mxu0 0.0
    %178 = vmatprep.subr.mxu0 0.0
    %179 = vmatpush1.msra.mxu0 0.0
    %180 = vmatprep.subr.mxu0 0.0
    %181 = vmatpush1.msra.mxu0 0.0
    %182 = vmatprep.subr.mxu0 0.0
    %183 = vmatpush1.msra.mxu0 0.0
    %184 = vmatprep.subr.mxu0 0.0
    %185 = vmatpush1.msra.mxu0 0.0
    %186 = vmatprep.subr.mxu0 0.0
    %187 = vmatpush1.msra.mxu0 0.0
    %188 = vmatprep.subr.mxu0 0.0
    %189 = vmatpush1.msra.mxu0 0.0
    %190 = vmatprep.subr.mxu0 0.0
    %191 = vmatpush1.msra.mxu0 0.0
    %192 = vmatprep.mubr.f32.mxu0 0.0
    %193 = vmatmul.mubr.f32.gmra.mrb[0].mxu0 %v99
    %v194 = vpop.f32.mrb[0].mxu0
    %v195 = vadd.f32 0.0, %v194
    %v196 = vpop.f32.mrb[0].mxu0
    %197 = vmatprep.mubr.f32.mxu0 0.0
    %198 = vmatmul.mubr.f32.gmra.mrb[0].mxu0 %v102
    %v199 = vpop.f32.mrb[0].mxu0
    %v200 = vadd.f32 0.0, %v199
    %v201 = vpop.f32.mrb[0].mxu0
    %202 = vmatprep.mubr.f32.mxu0 0.0
    %203 = vmatmul.mubr.f32.gmra.mrb[0].mxu0 %v105
    %v204 = vpop.f32.mrb[0].mxu0
    %v205 = vadd.f32 0.0, %v204
    %v206 = vpop.f32.mrb[0].mxu0
    %207 = vmatprep.mubr.f32.mxu0 0.0
    %208 = vmatmul.mubr.f32.gmra.mrb[0].mxu0 %v108
    %v209 = vpop.f32.mrb[0].mxu0
    %v210 = vadd.f32 0.0, %v209
    %v211 = vpop.f32.mrb[0].mxu0
    %212 = vmatprep.mubr.f32.mxu0 0.0
    %213 = vmatmul.mubr.f32.gmra.mrb[0].mxu0 %v111
    %v214 = vpop.f32.mrb[0].mxu0
    %v215 = vadd.f32 0.0, %v214
    %v216 = vpop.f32.mrb[0].mxu0
    %217 = vmatprep.mubr.f32.mxu0 0.0
    %218 = vmatmul.mubr.f32.gmra.mrb[0].mxu0 %v114
    %v219 = vpop.f32.mrb[0].mxu0
    %v220 = vadd.f32 0.0, %v219
    %v221 = vpop.f32.mrb[0].mxu0
    %222 = vmatprep.mubr.f32.mxu0 0.0
    %223 = vmatmul.mubr.f32.gmra.mrb[0].mxu0 %v117
    %v224 = vpop.f32.mrb[0].mxu0
    %v225 = vadd.f32 0.0, %v224
    %v226 = vpop.f32.mrb[0].mxu0
    %227 = vmatprep.mubr.f32.mxu0 0.0
    %228 = vmatmul.mubr.f32.gmra.mrb[0].mxu0 %v120
    %v229 = vpop.f32.mrb[0].mxu0
    %v230 = vadd.f32 0.0, %v229
    %v231 = vpop.f32.mrb[0].mxu0
    %232 = vmatprep.mubr.f32.mxu0 0.0
    %233 = vmatmul.mubr.f32.gmra.mrb[0].mxu0 %v123
    %v234 = vpop.f32.mrb[0].mxu0
    %v235 = vadd.f32 0.0, %v234
    %v236 = vpop.f32.mrb[0].mxu0
    %237 = vmatprep.mubr.f32.mxu0 0.0
    %238 = vmatmul.mubr.f32.gmra.mrb[0].mxu0 %v126
    %v239 = vpop.f32.mrb[0].mxu0
    %v240 = vadd.f32 0.0, %v239
    %v241 = vpop.f32.mrb[0].mxu0
    %242 = vdwg.mxu0
    %vm243 = vcmask 130048
    %v245 = vsel %vm243, %v89, 0
    %v248 = vsel %vm243, %v90, 0
    %250 = vmatprep.subr.mxu0 0.0
    %251 = vmatpush1.msra.mxu0 %v195
    %252 = vmatprep.subr.mxu0 0.0
    %253 = vmatpush1.msra.mxu0 %v200
    %254 = vmatprep.subr.mxu0 0.0
    %255 = vmatpush1.msra.mxu0 0.0
    %256 = vmatprep.subr.mxu0 0.0
    %257 = vmatpush1.msra.mxu0 0.0
    %258 = vmatprep.subr.mxu0 0.0
    %259 = vmatpush1.msra.mxu0 0.0
    %260 = vmatprep.subr.mxu0 0.0
    %261 = vmatpush1.msra.mxu0 0.0
    %262 = vmatprep.subr.mxu0 0.0
    %263 = vmatpush1.msra.mxu0 0.0
    %264 = vmatprep.subr.mxu0 0.0
    %265 = vmatpush1.msra.mxu0 0.0
    %266 = vmatprep.subr.mxu0 0.0
    %267 = vmatpush1.msra.mxu0 0.0
    %268 = vmatprep.subr.mxu0 0.0
    %269 = vmatpush1.msra.mxu0 0.0
    %270 = vmatprep.subr.mxu0 0.0
    %271 = vmatpush1.msra.mxu0 0.0
    %272 = vmatprep.subr.mxu0 0.0
    %273 = vmatpush1.msra.mxu0 0.0
    %274 = vmatprep.subr.mxu0 0.0
    %275 = vmatpush1.msra.mxu0 0.0
    %276 = vmatprep.subr.mxu0 0.0
    %277 = vmatpush1.msra.mxu0 0.0
    %278 = vmatprep.subr.mxu0 0.0
    %279 = vmatpush1.msra.mxu0 0.0
    %280 = vmatprep.subr.mxu0 0.0
    %281 = vmatpush1.msra.mxu0 0.0
    %282 = vmatprep.subr.mxu0 0.0
    %283 = vmatpush1.msra.mxu0 0.0
    %284 = vmatprep.subr.mxu0 0.0
    %285 = vmatpush1.msra.mxu0 0.0
    %286 = vmatprep.subr.mxu0 0.0
    %287 = vmatpush1.msra.mxu0 0.0
    %288 = vmatprep.subr.mxu0 0.0
    %289 = vmatpush1.msra.mxu0 0.0
    %290 = vmatprep.subr.mxu0 0.0
    %291 = vmatpush1.msra.mxu0 0.0
    %292 = vmatprep.subr.mxu0 0.0
    %293 = vmatpush1.msra.mxu0 0.0
    %294 = vmatprep.subr.mxu0 0.0
    %295 = vmatpush1.msra.mxu0 0.0
    %296 = vmatprep.subr.mxu0 0.0
    %297 = vmatpush1.msra.mxu0 0.0
    %298 = vmatprep.subr.mxu0 0.0
    %299 = vmatpush1.msra.mxu0 0.0
    %300 = vmatprep.subr.mxu0 0.0
    %301 = vmatpush1.msra.mxu0 0.0
    %302 = vmatprep.subr.mxu0 0.0
    %303 = vmatpush1.msra.mxu0 0.0
    %304 = vmatprep.subr.mxu0 0.0
    %305 = vmatpush1.msra.mxu0 0.0
    %306 = vmatprep.subr.mxu0 0.0
    %307 = vmatpush1.msra.mxu0 0.0
    %308 = vmatprep.subr.mxu0 0.0
    %309 = vmatpush1.msra.mxu0 0.0
    %310 = vmatprep.subr.mxu0 0.0
    %311 = vmatpush1.msra.mxu0 0.0
    %312 = vmatprep.subr.mxu0 0.0
    %313 = vmatpush1.msra.mxu0 0.0
    %314 = vmatprep.mubr.f32.mxu0 0.0
    %315 = vmatmul.mubr.f32.gmra.mrb[0].mxu0 %v245
    %v316 = vpop.f32.mrb[0].mxu0
    %v317 = vadd.f32 0.0, %v316
    %v318 = vpop.f32.mrb[0].mxu0
    %319 = vmatprep.mubr.f32.mxu0 0.0
    %320 = vmatmul.mubr.f32.gmra.mrb[0].mxu0 %v248
    %v321 = vpop.f32.mrb[0].mxu0
    %v322 = vadd.f32 0.0, %v321
    %v323 = vpop.f32.mrb[0].mxu0
    %324 = vdwg.mxu0
    %325 = vmatprep.subr.mxu0 0.0
    %326 = vmatpush1.msra.mxu0 %v205
    %327 = vmatprep.subr.mxu0 0.0
    %328 = vmatpush1.msra.mxu0 %v210
    %329 = vmatprep.subr.mxu0 0.0
    %330 = vmatpush1.msra.mxu0 0.0
    %331 = vmatprep.subr.mxu0 0.0
    %332 = vmatpush1.msra.mxu0 0.0
    %333 = vmatprep.subr.mxu0 0.0
    %334 = vmatpush1.msra.mxu0 0.0
    %335 = vmatprep.subr.mxu0 0.0
    %336 = vmatpush1.msra.mxu0 0.0
    %337 = vmatprep.subr.mxu0 0.0
    %338 = vmatpush1.msra.mxu0 0.0
    %339 = vmatprep.subr.mxu0 0.0
    %340 = vmatpush1.msra.mxu0 0.0
    %341 = vmatprep.subr.mxu0 0.0
    %342 = vmatpush1.msra.mxu0 0.0
    %343 = vmatprep.subr.mxu0 0.0
    %344 = vmatpush1.msra.mxu0 0.0
    %345 = vmatprep.subr.mxu0 0.0
    %346 = vmatpush1.msra.mxu0 0.0
    %347 = vmatprep.subr.mxu0 0.0
    %348 = vmatpush1.msra.mxu0 0.0
    %349 = vmatprep.subr.mxu0 0.0
    %350 = vmatpush1.msra.mxu0 0.0
    %351 = vmatprep.subr.mxu0 0.0
    %352 = vmatpush1.msra.mxu0 0.0
    %353 = vmatprep.subr.mxu0 0.0
    %354 = vmatpush1.msra.mxu0 0.0
    %355 = vmatprep.subr.mxu0 0.0
    %356 = vmatpush1.msra.mxu0 0.0
    %357 = vmatprep.subr.mxu0 0.0
    %358 = vmatpush1.msra.mxu0 0.0
    %359 = vmatprep.subr.mxu0 0.0
    %360 = vmatpush1.msra.mxu0 0.0
    %361 = vmatprep.subr.mxu0 0.0
    %362 = vmatpush1.msra.mxu0 0.0
    %363 = vmatprep.subr.mxu0 0.0
    %364 = vmatpush1.msra.mxu0 0.0
    %365 = vmatprep.subr.mxu0 0.0
    %366 = vmatpush1.msra.mxu0 0.0
    %367 = vmatprep.subr.mxu0 0.0
    %368 = vmatpush1.msra.mxu0 0.0
    %369 = vmatprep.subr.mxu0 0.0
    %370 = vmatpush1.msra.mxu0 0.0
    %371 = vmatprep.subr.mxu0 0.0
    %372 = vmatpush1.msra.mxu0 0.0
    %373 = vmatprep.subr.mxu0 0.0
    %374 = vmatpush1.msra.mxu0 0.0
    %375 = vmatprep.subr.mxu0 0.0
    %376 = vmatpush1.msra.mxu0 0.0
    %377 = vmatprep.subr.mxu0 0.0
    %378 = vmatpush1.msra.mxu0 0.0
    %379 = vmatprep.subr.mxu0 0.0
    %380 = vmatpush1.msra.mxu0 0.0
    %381 = vmatprep.subr.mxu0 0.0
    %382 = vmatpush1.msra.mxu0 0.0
    %383 = vmatprep.subr.mxu0 0.0
    %384 = vmatpush1.msra.mxu0 0.0
    %385 = vmatprep.subr.mxu0 0.0
    %386 = vmatpush1.msra.mxu0 0.0
    %387 = vmatprep.subr.mxu0 0.0
    %388 = vmatpush1.msra.mxu0 0.0
    %389 = vmatprep.mubr.f32.mxu0 0.0
    %390 = vmatmul.mubr.f32.gmra.mrb[0].mxu0 %v245
    %v391 = vpop.f32.mrb[0].mxu0
    %v392 = vadd.f32 0.0, %v391
    %v393 = vpop.f32.mrb[0].mxu0
    %394 = vmatprep.mubr.f32.mxu0 0.0
    %395 = vmatmul.mubr.f32.gmra.mrb[0].mxu0 %v248
    %v396 = vpop.f32.mrb[0].mxu0
    %v397 = vadd.f32 0.0, %v396
    %v398 = vpop.f32.mrb[0].mxu0
    %399 = vdwg.mxu0
    %400 = vmatprep.subr.mxu0 0.0
    %401 = vmatpush1.msra.mxu0 %v215
    %402 = vmatprep.subr.mxu0 0.0
    %403 = vmatpush1.msra.mxu0 %v220
    %404 = vmatprep.subr.mxu0 0.0
    %405 = vmatpush1.msra.mxu0 0.0
    %406 = vmatprep.subr.mxu0 0.0
    %407 = vmatpush1.msra.mxu0 0.0
    %408 = vmatprep.subr.mxu0 0.0
    %409 = vmatpush1.msra.mxu0 0.0
    %410 = vmatprep.subr.mxu0 0.0
    %411 = vmatpush1.msra.mxu0 0.0
    %412 = vmatprep.subr.mxu0 0.0
    %413 = vmatpush1.msra.mxu0 0.0
    %414 = vmatprep.subr.mxu0 0.0
    %415 = vmatpush1.msra.mxu0 0.0
    %416 = vmatprep.subr.mxu0 0.0
    %417 = vmatpush1.msra.mxu0 0.0
    %418 = vmatprep.subr.mxu0 0.0
    %419 = vmatpush1.msra.mxu0 0.0
    %420 = vmatprep.subr.mxu0 0.0
    %421 = vmatpush1.msra.mxu0 0.0
    %422 = vmatprep.subr.mxu0 0.0
    %423 = vmatpush1.msra.mxu0 0.0
    %424 = vmatprep.subr.mxu0 0.0
    %425 = vmatpush1.msra.mxu0 0.0
    %426 = vmatprep.subr.mxu0 0.0
    %427 = vmatpush1.msra.mxu0 0.0
    %428 = vmatprep.subr.mxu0 0.0
    %429 = vmatpush1.msra.mxu0 0.0
    %430 = vmatprep.subr.mxu0 0.0
    %431 = vmatpush1.msra.mxu0 0.0
    %432 = vmatprep.subr.mxu0 0.0
    %433 = vmatpush1.msra.mxu0 0.0
    %434 = vmatprep.subr.mxu0 0.0
    %435 = vmatpush1.msra.mxu0 0.0
    %436 = vmatprep.subr.mxu0 0.0
    %437 = vmatpush1.msra.mxu0 0.0
    %438 = vmatprep.subr.mxu0 0.0
    %439 = vmatpush1.msra.mxu0 0.0
    %440 = vmatprep.subr.mxu0 0.0
    %441 = vmatpush1.msra.mxu0 0.0
    %442 = vmatprep.subr.mxu0 0.0
    %443 = vmatpush1.msra.mxu0 0.0
    %444 = vmatprep.subr.mxu0 0.0
    %445 = vmatpush1.msra.mxu0 0.0
    %446 = vmatprep.subr.mxu0 0.0
    %447 = vmatpush1.msra.mxu0 0.0
    %448 = vmatprep.subr.mxu0 0.0
    %449 = vmatpush1.msra.mxu0 0.0
    %450 = vmatprep.subr.mxu0 0.0
    %451 = vmatpush1.msra.mxu0 0.0
    %452 = vmatprep.subr.mxu0 0.0
    %453 = vmatpush1.msra.mxu0 0.0
    %454 = vmatprep.subr.mxu0 0.0
    %455 = vmatpush1.msra.mxu0 0.0
    %456 = vmatprep.subr.mxu0 0.0
    %457 = vmatpush1.msra.mxu0 0.0
    %458 = vmatprep.subr.mxu0 0.0
    %459 = vmatpush1.msra.mxu0 0.0
    %460 = vmatprep.subr.mxu0 0.0
    %461 = vmatpush1.msra.mxu0 0.0
    %462 = vmatprep.subr.mxu0 0.0
    %463 = vmatpush1.msra.mxu0 0.0
    %464 = vmatprep.mubr.f32.mxu0 0.0
    %465 = vmatmul.mubr.f32.gmra.mrb[0].mxu0 %v245
    %v466 = vpop.f32.mrb[0].mxu0
    %v467 = vadd.f32 0.0, %v466
    %v468 = vpop.f32.mrb[0].mxu0
    %469 = vmatprep.mubr.f32.mxu0 0.0
    %470 = vmatmul.mubr.f32.gmra.mrb[0].mxu0 %v248
    %v471 = vpop.f32.mrb[0].mxu0
    %v472 = vadd.f32 0.0, %v471
    %v473 = vpop.f32.mrb[0].mxu0
    %474 = vdwg.mxu0
    %475 = vmatprep.subr.mxu0 0.0
    %476 = vmatpush1.msra.mxu0 %v225
    %477 = vmatprep.subr.mxu0 0.0
    %478 = vmatpush1.msra.mxu0 %v230
    %479 = vmatprep.subr.mxu0 0.0
    %480 = vmatpush1.msra.mxu0 0.0
    %481 = vmatprep.subr.mxu0 0.0
    %482 = vmatpush1.msra.mxu0 0.0
    %483 = vmatprep.subr.mxu0 0.0
    %484 = vmatpush1.msra.mxu0 0.0
    %485 = vmatprep.subr.mxu0 0.0
    %486 = vmatpush1.msra.mxu0 0.0
    %487 = vmatprep.subr.mxu0 0.0
    %488 = vmatpush1.msra.mxu0 0.0
    %489 = vmatprep.subr.mxu0 0.0
    %490 = vmatpush1.msra.mxu0 0.0
    %491 = vmatprep.subr.mxu0 0.0
    %492 = vmatpush1.msra.mxu0 0.0
    %493 = vmatprep.subr.mxu0 0.0
    %494 = vmatpush1.msra.mxu0 0.0
    %495 = vmatprep.subr.mxu0 0.0
    %496 = vmatpush1.msra.mxu0 0.0
    %497 = vmatprep.subr.mxu0 0.0
    %498 = vmatpush1.msra.mxu0 0.0
    %499 = vmatprep.subr.mxu0 0.0
    %500 = vmatpush1.msra.mxu0 0.0
    %501 = vmatprep.subr.mxu0 0.0
    %502 = vmatpush1.msra.mxu0 0.0
    %503 = vmatprep.subr.mxu0 0.0
    %504 = vmatpush1.msra.mxu0 0.0
    %505 = vmatprep.subr.mxu0 0.0
    %506 = vmatpush1.msra.mxu0 0.0
    %507 = vmatprep.subr.mxu0 0.0
    %508 = vmatpush1.msra.mxu0 0.0
    %509 = vmatprep.subr.mxu0 0.0
    %510 = vmatpush1.msra.mxu0 0.0
    %511 = vmatprep.subr.mxu0 0.0
    %512 = vmatpush1.msra.mxu0 0.0
    %513 = vmatprep.subr.mxu0 0.0
    %514 = vmatpush1.msra.mxu0 0.0
    %515 = vmatprep.subr.mxu0 0.0
    %516 = vmatpush1.msra.mxu0 0.0
    %517 = vmatprep.subr.mxu0 0.0
    %518 = vmatpush1.msra.mxu0 0.0
    %519 = vmatprep.subr.mxu0 0.0
    %520 = vmatpush1.msra.mxu0 0.0
    %521 = vmatprep.subr.mxu0 0.0
    %522 = vmatpush1.msra.mxu0 0.0
    %523 = vmatprep.subr.mxu0 0.0
    %524 = vmatpush1.msra.mxu0 0.0
    %525 = vmatprep.subr.mxu0 0.0
    %526 = vmatpush1.msra.mxu0 0.0
    %527 = vmatprep.subr.mxu0 0.0
    %528 = vmatpush1.msra.mxu0 0.0
    %529 = vmatprep.subr.mxu0 0.0
    %530 = vmatpush1.msra.mxu0 0.0
    %531 = vmatprep.subr.mxu0 0.0
    %532 = vmatpush1.msra.mxu0 0.0
    %533 = vmatprep.subr.mxu0 0.0
    %534 = vmatpush1.msra.mxu0 0.0
    %535 = vmatprep.subr.mxu0 0.0
    %536 = vmatpush1.msra.mxu0 0.0
    %537 = vmatprep.subr.mxu0 0.0
    %538 = vmatpush1.msra.mxu0 0.0
    %539 = vmatprep.mubr.f32.mxu0 0.0
    %540 = vmatmul.mubr.f32.gmra.mrb[0].mxu0 %v245
    %v541 = vpop.f32.mrb[0].mxu0
    %v542 = vadd.f32 0.0, %v541
    %v543 = vpop.f32.mrb[0].mxu0
    %544 = vmatprep.mubr.f32.mxu0 0.0
    %545 = vmatmul.mubr.f32.gmra.mrb[0].mxu0 %v248
    %v546 = vpop.f32.mrb[0].mxu0
    %v547 = vadd.f32 0.0, %v546
    %v548 = vpop.f32.mrb[0].mxu0
    %549 = vdwg.mxu0
    %550 = vmatprep.subr.mxu0 0.0
    %551 = vmatpush1.msra.mxu0 %v235
    %552 = vmatprep.subr.mxu0 0.0
    %553 = vmatpush1.msra.mxu0 %v240
    %554 = vmatprep.subr.mxu0 0.0
    %555 = vmatpush1.msra.mxu0 0.0
    %556 = vmatprep.subr.mxu0 0.0
    %557 = vmatpush1.msra.mxu0 0.0
    %558 = vmatprep.subr.mxu0 0.0
    %559 = vmatpush1.msra.mxu0 0.0
    %560 = vmatprep.subr.mxu0 0.0
    %561 = vmatpush1.msra.mxu0 0.0
    %562 = vmatprep.subr.mxu0 0.0
    %563 = vmatpush1.msra.mxu0 0.0
    %564 = vmatprep.subr.mxu0 0.0
    %565 = vmatpush1.msra.mxu0 0.0
    %566 = vmatprep.subr.mxu0 0.0
    %567 = vmatpush1.msra.mxu0 0.0
    %568 = vmatprep.subr.mxu0 0.0
    %569 = vmatpush1.msra.mxu0 0.0
    %570 = vmatprep.subr.mxu0 0.0
    %571 = vmatpush1.msra.mxu0 0.0
    %572 = vmatprep.subr.mxu0 0.0
    %573 = vmatpush1.msra.mxu0 0.0
    %574 = vmatprep.subr.mxu0 0.0
    %575 = vmatpush1.msra.mxu0 0.0
    %576 = vmatprep.subr.mxu0 0.0
    %577 = vmatpush1.msra.mxu0 0.0
    %578 = vmatprep.subr.mxu0 0.0
    %579 = vmatpush1.msra.mxu0 0.0
    %580 = vmatprep.subr.mxu0 0.0
    %581 = vmatpush1.msra.mxu0 0.0
    %582 = vmatprep.subr.mxu0 0.0
    %583 = vmatpush1.msra.mxu0 0.0
    %584 = vmatprep.subr.mxu0 0.0
    %585 = vmatpush1.msra.mxu0 0.0
    %586 = vmatprep.subr.mxu0 0.0
    %587 = vmatpush1.msra.mxu0 0.0
    %588 = vmatprep.subr.mxu0 0.0
    %589 = vmatpush1.msra.mxu0 0.0
    %590 = vmatprep.subr.mxu0 0.0
    %591 = vmatpush1.msra.mxu0 0.0
    %592 = vmatprep.subr.mxu0 0.0
    %593 = vmatpush1.msra.mxu0 0.0
    %594 = vmatprep.subr.mxu0 0.0
    %595 = vmatpush1.msra.mxu0 0.0
    %596 = vmatprep.subr.mxu0 0.0
    %597 = vmatpush1.msra.mxu0 0.0
    %598 = vmatprep.subr.mxu0 0.0
    %599 = vmatpush1.msra.mxu0 0.0
    %600 = vmatprep.subr.mxu0 0.0
    %601 = vmatpush1.msra.mxu0 0.0
    %602 = vmatprep.subr.mxu0 0.0
    %603 = vmatpush1.msra.mxu0 0.0
    %604 = vmatprep.subr.mxu0 0.0
    %605 = vmatpush1.msra.mxu0 0.0
    %606 = vmatprep.subr.mxu0 0.0
    %607 = vmatpush1.msra.mxu0 0.0
    %608 = vmatprep.subr.mxu0 0.0
    %609 = vmatpush1.msra.mxu0 0.0
    %610 = vmatprep.subr.mxu0 0.0
    %611 = vmatpush1.msra.mxu0 0.0
    %612 = vmatprep.subr.mxu0 0.0
    %613 = vmatpush1.msra.mxu0 0.0
    %614 = vmatprep.mubr.f32.mxu0 0.0
    %615 = vmatmul.mubr.f32.gmra.mrb[0].mxu0 %v245
    %v616 = vpop.f32.mrb[0].mxu0
    %v617 = vadd.f32 0.0, %v616
    %v618 = vpop.f32.mrb[0].mxu0
    %619 = vmatprep.mubr.f32.mxu0 0.0
    %620 = vmatmul.mubr.f32.gmra.mrb[0].mxu0 %v248
    %v621 = vpop.f32.mrb[0].mxu0
    %v622 = vadd.f32 0.0, %v621
    %v623 = vpop.f32.mrb[0].mxu0
    %624 = vdwg.mxu0
    %v625 = vmul.f32 %v317, %v317
    %v626 = vmul.f32 %v322, %v322
    %v627 = vmul.f32 %v392, %v392
    %v628 = vmul.f32 %v397, %v397
    %v629 = vmul.f32 %v317, %v392
    %v630 = vmul.f32 %v322, %v397
    %v631 = vsub.f32 %v467, %v625
    %v632 = vsub.f32 %v472, %v626
    %v633 = vsub.f32 %v542, %v627
    %v634 = vsub.f32 %v547, %v628
    %v635 = vsub.f32 %v617, %v629
    %v636 = vsub.f32 %v622, %v630
    %v637 = vmul.f32 %v629, 2.0
    %v638 = vmul.f32 %v630, 2.0
    %v639 = vadd.f32 %v637, 0.0001
    %v640 = vadd.f32 %v638, 0.0001
    %v641 = vmul.f32 %v635, 2.0
    %v642 = vmul.f32 %v636, 2.0
    %v643 = vadd.f32 %v641, 0.0009
    %v644 = vadd.f32 %v642, 0.0009
    %v645 = vmul.f32 %v639, %v643
    %v646 = vmul.f32 %v640, %v644
    %v647 = vadd.f32 %v625, %v627
    %v648 = vadd.f32 %v626, %v628
    %v649 = vadd.f32 %v647, 0.0001
    %v650 = vadd.f32 %v648, 0.0001
    %v651 = vadd.f32 %v631, %v633
    %v652 = vadd.f32 %v632, %v634
    %v653 = vadd.f32 %v651, 0.0009
    %v654 = vadd.f32 %v652, 0.0009
    %v655 = vmul.f32 %v649, %v653
    %v656 = vmul.f32 %v650, %v654
    %v657 = vrcp.pop %v655
    %v658 = vmul.f32 %v645, %v657
    %v659 = vrcp.pop %v656
    %v660 = vmul.f32 %v646, %v659
    %v661 = vsel %vm97, %v658, 0.0
    %v662 = vsel %vm97, %v660, 0.0
    %v663 = vadd.f32 %v661, %v662
    %v664 = vrot.slane %v663, 4
    %v665 = vadd.f32 %v663, %v664
    %v666 = vrot.slane %v665, 2
    %v667 = vadd.f32 %v665, %v666
    %v668 = vrot.slane %v667, 1
    %v669 = vadd.f32 %v667, %v668
    %vm670 = vcmask 778240
    %671 = vst.msk [vmem:[#allocation10] sm:$0x1] %vm670, %v669
    // Predicated region
    $region34: #{tpu_custom_call.1} parent=1 // pred_check
      _
    $region35: #{tpu_custom_call.1} parent=1 // pred_check_branch
      %673 = sbr.rel (0) target = $region37
    $region36: #{tpu_custom_call.1} parent=1 // pred_region
      %s675 = ssub.s32 16, 16
      %676 = vsyncadd [#allocation4], %s675
      %s678 = sshll.u32 [#allocation10], 4
      %s679 = int_to_ptr.vmem [resolvable:$true] %s678
      %681 = dma.vmem_to_hbm [thread:$0]  %s679, 16, %s4, [#allocation4]
    $region37: #{tpu_custom_call.1} parent=1 // pred_fallthru
      _
    // Predicated region
    $region38: #{tpu_custom_call.1} parent=1 // pred_check
      _
    $region39: #{tpu_custom_call.1} parent=1 // pred_check_branch
      %683 = sbr.rel (0) target = $region41
    $region40: #{tpu_custom_call.1} parent=1 // pred_region
      %684 = dma.done [#allocation4], 16
    $region41: #{tpu_custom_call.1} parent=1 // pred_fallthru
      _
    %685 = vsyncpa [#allocation3], 1
    %686 = vsyncpa [#allocation6], 1
    %687 = vsyncpa [#allocation9], 1
    %688 = vsyncpa [#allocation4], 1

</llo_original>
